<compile_context>
chip_gen: v6e
topology: v6e:2x2x1
jax: 0.10.0
libtpu: 0.0.40
codegen_flags: <defaults>
</compile_context>

<pallas_src>
import functools
import math

import jax
import jax.numpy as jnp
from jax.experimental import pallas as pl
from jax.experimental.pallas import tpu as pltpu


def _round_up(x, m):
    return ((x + m - 1) // m) * m


def _pca_kernel(x_ref, we_ref, be_ref, wd_ref, bd_ref, enc_ref, dec_ref):
    # x_ref : (TILE_M, IMG_P)  input dtype (f32); cast to MXU dtype in-kernel
    # we_ref: (IMG_P, LAT_P)   compute dtype     be_ref: (1, LAT_P) f32
    # wd_ref: (LAT_P, IMG_P)   compute dtype     bd_ref: (1, IMG_P) f32
    # enc_ref: (TILE_M, LAT_P) out dtype         dec_ref: (TILE_M, IMG_P) out dtype
    x = x_ref[...].astype(we_ref.dtype)          # VPU cast (free slot); x read once at 4 B/elem

    # Encoder: f32 MXU accumulation + f32 bias add.
    enc_f32 = jnp.dot(x, we_ref[...], preferred_element_type=jnp.float32)
    enc_f32 = enc_f32 + be_ref[...]
    enc_ref[...] = enc_f32.astype(enc_ref.dtype)

    # Decoder consumes the f32 encoder value directly (single cast to MXU dtype).
    dec_f32 = jnp.dot(enc_f32.astype(wd_ref.dtype), wd_ref[...],
                      preferred_element_type=jnp.float32)
    dec_f32 = dec_f32 + bd_ref[...]
    dec_ref[...] = dec_f32.astype(dec_ref.dtype)


def prepare_pca_params(w_enc, b_enc, w_dec, b_dec, compute_dtype=jnp.bfloat16):
    """One-time weight prep (transpose, pad to lane multiples, cast). Reuse across calls."""
    latent, img_size = w_enc.shape               # torch Linear weight is (out, in)
    img_p = _round_up(img_size, 128)
    lat_p = _round_up(latent, 128)                # pad only up to 128, no further
    we_t = jnp.pad(w_enc.T.astype(compute_dtype),
                   ((0, img_p - img_size), (0, lat_p - latent)))
    wd_t = jnp.pad(w_dec.T.astype(compute_dtype),
                   ((0, lat_p - latent), (0, img_p - img_size)))
    be = jnp.pad(b_enc.astype(jnp.float32), (0, lat_p - latent)).reshape(1, lat_p)
    bd = jnp.pad(b_dec.astype(jnp.float32), (0, img_p - img_size)).reshape(1, img_p)
    return we_t, be, wd_t, bd


def pca_forward(frames, we_t, be, wd_t, bd, *, img_shape, latent_dim,
                max_tile_m=1024, out_dtype=None):
    """frames: (N, C, H, W) -> (encoding (N, latent_dim), decoding (N, C, H, W))."""
    N = frames.shape[0]
    img_size = math.prod(img_shape)
    img_p, lat_p = we_t.shape                    # static padded feature sizes
    in_dtype = frames.dtype
    out_dtype = in_dtype if out_dtype is None else out_dtype

    # Flatten NCHW -> (N, img_size): free reshape, NO cast, NO batch padding.
    x = frames.reshape(N, img_size)
    if img_p != img_size:
        # Keep the K-tail zero so padded contraction columns contribute nothing.
        x = jnp.pad(x, ((0, 0), (0, img_p - img_size)))

    # Batch tile: multiple of 8 (or == N when N < 8). Keep >= 2 tiles when N >= 16
    # so v7x's two TensorCores both get work; the partial last tile is masked by
    # Pallas (no wrapper-side batch padding, no output slices over rows).
    if N <= 8:
        tile_m = N
    else:
        n_tiles = max(1, pl.cdiv(N, max_tile_m))
        if N >= 16 and n_tiles == 1:
            n_tiles = 2
        tile_m = _round_up(pl.cdiv(N, n_tiles), 8)

    in_bytes = jnp.dtype(in_dtype).itemsize
    o_bytes = jnp.dtype(out_dtype).itemsize
    c_bytes = jnp.dtype(we_t.dtype).itemsize

    def vmem_need(tm):
        return (2 * tm * img_p * in_bytes            # double-buffered x tiles (f32)
                + 2 * tm * img_p * o_bytes           # dec out tiles
                + 2 * tm * lat_p * o_bytes           # enc out tiles
                + 2 * img_p * lat_p * c_bytes        # resident weights
                + 2 * (img_p + lat_p) * 4)           # biases

    VMEM_BUDGET = 48 * 1024 * 1024                   # fits v7x's 64 MiB w/ headroom
    while tile_m > 8 and vmem_need(tile_m) > VMEM_BUDGET:
        tile_m = max(8, _round_up(tile_m // 2, 8))

    grid = (pl.cdiv(N, tile_m),)

    vmem_limit = int(min(max(int(vmem_need(tile_m) * 1.5), 16 * 1024 * 1024),
                         56 * 1024 * 1024))

    # Advisory cost estimate (two matmuls) at logical sizes.
    flops = 4 * N * img_p * lat_p
    bytes_accessed = (N * img_p * in_bytes
                      + 2 * img_p * lat_p * c_bytes
                      + (img_p + lat_p) * 4
                      + N * lat_p * o_bytes
                      + N * img_p * o_bytes)

    enc, dec = pl.pallas_call(
        _pca_kernel,
        grid=grid,
        in_specs=[
            pl.BlockSpec((tile_m, img_p), lambda i: (i, 0)),   # x: tiled over batch
            pl.BlockSpec((img_p, lat_p), lambda i: (0, 0)),    # W_enc^T: VMEM-resident
            pl.BlockSpec((1, lat_p), lambda i: (0, 0)),        # b_enc: resident
            pl.BlockSpec((lat_p, img_p), lambda i: (0, 0)),    # W_dec^T: resident
            pl.BlockSpec((1, img_p), lambda i: (0, 0)),        # b_dec: resident
        ],
        out_specs=(
            pl.BlockSpec((tile_m, lat_p), lambda i: (i, 0)),
            pl.BlockSpec((tile_m, img_p), lambda i: (i, 0)),
        ),
        out_shape=(
            jax.ShapeDtypeStruct((N, lat_p), out_dtype),       # logical N rows: no row slice
            jax.ShapeDtypeStruct((N, img_p), out_dtype),
        ),
        compiler_params=pltpu.CompilerParams(
            dimension_semantics=("parallel",),
            vmem_limit_bytes=vmem_limit),
        cost_estimate=pl.CostEstimate(
            flops=flops, transcendentals=0, bytes_accessed=bytes_accessed),
    )(x, we_t, be, wd_t, bd)

    if lat_p != latent_dim:
        enc = enc[:, :latent_dim]                # tiny (N x 128) slice
    if img_p != img_size:
        dec = dec[:, :img_size]
    dec = dec.reshape(N, *img_shape)
    return enc, dec


if __name__ == "__main__":
    # Small shapes consistent with the module's forward.
    N = 2
    img_shape = (4, 16, 16)          # C, H, W
    latent_dim = 100
    img_size = 4 * 16 * 16           # 1024

    key = jax.random.PRNGKey(0)
    k_x, k_we, k_be, k_wd, k_bd = jax.random.split(key, 5)

    frames = jax.random.normal(k_x, (N, *img_shape), dtype=jnp.float32)

    # Deterministic "PyTorch-like" uniform init (U(-1/sqrt(fan_in), +1/sqrt(fan_in))).
    bnd_e = 1.0 / (img_size ** 0.5)
    bnd_d = 1.0 / (latent_dim ** 0.5)
    w_enc = jax.random.uniform(k_we, (latent_dim, img_size), jnp.float32, -bnd_e, bnd_e)
    b_enc = jax.random.uniform(k_be, (latent_dim,), jnp.float32, -bnd_e, bnd_e)
    w_dec = jax.random.uniform(k_wd, (img_size, latent_dim), jnp.float32, -bnd_d, bnd_d)
    b_dec = jax.random.uniform(k_bd, (img_size,), jnp.float32, -bnd_d, bnd_d)

    # Hoisted, reusable weight prep (done once, reused for every batch).
    we_t, be, wd_t, bd = prepare_pca_params(w_enc, b_enc, w_dec, b_dec)

    fwd = jax.jit(functools.partial(pca_forward, img_shape=img_shape,
                                    latent_dim=latent_dim))
    enc, dec = fwd(frames, we_t, be, wd_t, bd)
    jax.block_until_ready((enc, dec))

    assert enc.shape == (N, latent_dim)
    assert dec.shape == (N, *img_shape)

    # Tight check vs. a reference using the same bf16 MXU inputs / f32 accumulation.
    x_flat = frames.reshape(N, -1)
    enc_ref = jnp.dot(x_flat.astype(jnp.bfloat16), w_enc.T.astype(jnp.bfloat16),
                      preferred_element_type=jnp.float32) + b_enc
    dec_ref = (jnp.dot(enc_ref.astype(jnp.bfloat16), w_dec.T.astype(jnp.bfloat16),
                       preferred_element_type=jnp.float32) + b_dec
               ).reshape(N, *img_shape)
    assert jnp.allclose(enc, enc_ref, atol=2e-3, rtol=2e-3)
    assert jnp.allclose(dec, dec_ref, atol=2e-3, rtol=2e-3)

    # Loose sanity check vs. the pure-f32 PyTorch-equivalent forward (bf16 tolerance).
    enc_f32 = x_flat @ w_enc.T + b_enc
    dec_f32 = (enc_f32 @ w_dec.T + b_dec).reshape(N, *img_shape)
    assert jnp.allclose(enc, enc_f32, atol=1e-1, rtol=1e-1)
    assert jnp.allclose(dec, dec_f32, atol=1e-1, rtol=1e-1)

    print("KERNEL_OK")
</pallas_src>

<mosaic_0001>
module attributes {stable_mosaic.version = 11 : i64} {
  func.func @_pca_kernel(%arg0: i32, %arg1: memref<2x1024xf32, #tpu.memory_space<vmem>>, %arg2: memref<1024x128xbf16, #tpu.memory_space<vmem>>, %arg3: memref<1x128xf32, #tpu.memory_space<vmem>>, %arg4: memref<128x1024xbf16, #tpu.memory_space<vmem>>, %arg5: memref<1x1024xf32, #tpu.memory_space<vmem>>, %arg6: memref<2x128xf32, #tpu.memory_space<vmem>>, %arg7: memref<2x1024xf32, #tpu.memory_space<vmem>>) attributes {dimension_semantics = [#tpu.dimension_semantics<parallel>], iteration_bounds = array<i64: 1>, scalar_prefetch = 0 : i64, scratch_operands = 0 : i64, tpu.core_type = #tpu.core_type<tc>, window_params = [{transform_indices = @transform_0, window_bounds = array<i64: 2, 1024>}, {pipeline_mode = #tpu.pipeline_mode<synchronous>, transform_indices = @transform_1, window_bounds = array<i64: 1024, 128>}, {pipeline_mode = #tpu.pipeline_mode<synchronous>, transform_indices = @transform_2, window_bounds = array<i64: 1, 128>}, {pipeline_mode = #tpu.pipeline_mode<synchronous>, transform_indices = @transform_3, window_bounds = array<i64: 128, 1024>}, {pipeline_mode = #tpu.pipeline_mode<synchronous>, transform_indices = @transform_4, window_bounds = array<i64: 1, 1024>}, {transform_indices = @transform_5, window_bounds = array<i64: 2, 128>}, {transform_indices = @transform_6, window_bounds = array<i64: 2, 1024>}]} {
    %c0 = arith.constant 0 : index
    %c0_0 = arith.constant 0 : index
    %0 = vector.load %arg1[%c0, %c0_0] : memref<2x1024xf32, #tpu.memory_space<vmem>>, vector<2x1024xf32>
    %1 = arith.truncf %0 : vector<2x1024xf32> to vector<2x1024xbf16>
    %c0_1 = arith.constant 0 : index
    %c0_2 = arith.constant 0 : index
    %2 = vector.load %arg2[%c0_1, %c0_2] : memref<1024x128xbf16, #tpu.memory_space<vmem>>, vector<1024x128xbf16>
    %cst = arith.constant dense<0.000000e+00> : vector<2x128xf32>
    %3 = tpu.matmul %1, %2, %cst {dimension_numbers = #tpu.dot_dimension_numbers<[1], [0], [0], [1], [0, 0, 1, 1], [], []>} : vector<2x1024xbf16>, vector<1024x128xbf16>, vector<2x128xf32> -> vector<2x128xf32>
    %c0_3 = arith.constant 0 : index
    %c0_4 = arith.constant 0 : index
    %4 = vector.load %arg3[%c0_3, %c0_4] : memref<1x128xf32, #tpu.memory_space<vmem>>, vector<1x128xf32>
    %5 = vector.broadcast %4 : vector<1x128xf32> to vector<2x128xf32>
    %6 = arith.addf %3, %5 : vector<2x128xf32>
    %c0_5 = arith.constant 0 : index
    %c0_6 = arith.constant 0 : index
    %7 = vector.load %arg6[%c0_5, %c0_6] : memref<2x128xf32, #tpu.memory_space<vmem>>, vector<2x128xf32>
    tpu.vector_store %arg6[%c0_5, %c0_6], %6 {strides = array<i32>} : memref<2x128xf32, #tpu.memory_space<vmem>>, vector<2x128xf32>,
    %8 = arith.truncf %6 : vector<2x128xf32> to vector<2x128xbf16>
    %c0_7 = arith.constant 0 : index
    %c0_8 = arith.constant 0 : index
    %9 = vector.load %arg4[%c0_7, %c0_8] : memref<128x1024xbf16, #tpu.memory_space<vmem>>, vector<128x1024xbf16>
    %cst_9 = arith.constant dense<0.000000e+00> : vector<2x1024xf32>
    %10 = tpu.matmul %8, %9, %cst_9 {dimension_numbers = #tpu.dot_dimension_numbers<[1], [0], [0], [1], [0, 0, 1, 1], [], []>} : vector<2x128xbf16>, vector<128x1024xbf16>, vector<2x1024xf32> -> vector<2x1024xf32>
    %c0_10 = arith.constant 0 : index
    %c0_11 = arith.constant 0 : index
    %11 = vector.load %arg5[%c0_10, %c0_11] : memref<1x1024xf32, #tpu.memory_space<vmem>>, vector<1x1024xf32>
    %12 = vector.broadcast %11 : vector<1x1024xf32> to vector<2x1024xf32>
    %13 = arith.addf %10, %12 : vector<2x1024xf32>
    %c0_12 = arith.constant 0 : index
    %c0_13 = arith.constant 0 : index
    %14 = vector.load %arg7[%c0_12, %c0_13] : memref<2x1024xf32, #tpu.memory_space<vmem>>, vector<2x1024xf32>
    tpu.vector_store %arg7[%c0_12, %c0_13], %13 {strides = array<i32>} : memref<2x1024xf32, #tpu.memory_space<vmem>>, vector<2x1024xf32>,
    return
  }
  func.func @transform_0(%arg0: i32) -> (i32, i32) {
    %c0_i32 = arith.constant 0 : i32
    %c0_i32_0 = arith.constant 0 : i32
    return %arg0, %c0_i32 : i32, i32
  }
  func.func @transform_1(%arg0: i32) -> (i32, i32) {
    %c0_i32 = arith.constant 0 : i32
    %c0_i32_0 = arith.constant 0 : i32
    %c0_i32_1 = arith.constant 0 : i32
    return %c0_i32, %c0_i32_0 : i32, i32
  }
  func.func @transform_2(%arg0: i32) -> (i32, i32) {
    %c0_i32 = arith.constant 0 : i32
    %c0_i32_0 = arith.constant 0 : i32
    %c0_i32_1 = arith.constant 0 : i32
    return %c0_i32, %c0_i32_0 : i32, i32
  }
  func.func @transform_3(%arg0: i32) -> (i32, i32) {
    %c0_i32 = arith.constant 0 : i32
    %c0_i32_0 = arith.constant 0 : i32
    %c0_i32_1 = arith.constant 0 : i32
    return %c0_i32, %c0_i32_0 : i32, i32
  }
  func.func @transform_4(%arg0: i32) -> (i32, i32) {
    %c0_i32 = arith.constant 0 : i32
    %c0_i32_0 = arith.constant 0 : i32
    %c0_i32_1 = arith.constant 0 : i32
    return %c0_i32, %c0_i32_0 : i32, i32
  }
  func.func @transform_5(%arg0: i32) -> (i32, i32) {
    %c0_i32 = arith.constant 0 : i32
    %c0_i32_0 = arith.constant 0 : i32
    return %arg0, %c0_i32 : i32, i32
  }
  func.func @transform_6(%arg0: i32) -> (i32, i32) {
    %c0_i32 = arith.constant 0 : i32
    %c0_i32_0 = arith.constant 0 : i32
    return %arg0, %c0_i32 : i32, i32
  }
}

</mosaic_0001>

<llo_original>
// kernel: pca_forward.1
$region0: #{pca_forward.1}
  #allocation0 [shape = 'u32[]', space=smem, size = 0x4, offset = 0x4, fixed_abs, tag = 'smem constant byte address 0x4 - core index']
  #allocation1 [shape = 'u32[144,128]{1,0:T(1,128)}', space=vmem, size = 0x12000, scoped, tag = 'internal scratch']
  %s0 = inlined_call_operand.vmem [shape: f32[2,1024], index: 0, kind: input, shape index: {}]
  %s1 = inlined_call_operand.hbm [shape: bf16[1024,128], index: 1, kind: input, shape index: {}]
  %s2 = inlined_call_operand.vmem [shape: f32[1,128], index: 2, kind: input, shape index: {}]
  %s3 = inlined_call_operand.hbm [shape: bf16[128,1024], index: 3, kind: input, shape index: {}]
  %s4 = inlined_call_operand.vmem [shape: f32[1,1024], index: 4, kind: input, shape index: {}]
  %s5 = inlined_call_operand.hbm [shape: f32[2,128], index: 5, kind: output, shape index: {0}]
  %s6 = inlined_call_operand.vmem [shape: f32[2,1024], index: 6, kind: output, shape index: {1}]
  %7 = xla_tuple %s5, %s6
  %s8 = sld [smem:[#allocation0]]
  $region46: #{pca_forward.1} parent=0
    _
  %s10 = ssub.s32 1, %s8
  %s11 = scalar_select 0, %s10, %s8
  $region1: #{pca_forward.1} parent=0
    #allocation2 [shape = 'u8[262144]{0}', space=vmem, size = 0x40000, scoped, tag = 'input window, operand 1, single buffered']
    #allocation3 [shape = 's32[1]{0}', space=sflag, size = 0x4, scoped, tag = 'scoped memory for pca_forward.1']
    #allocation4 [shape = 's32[1]{0}', space=sflag, size = 0x4, scoped, tag = 'scoped memory for pca_forward.1']
    #allocation5 [shape = 'u8[262144]{0}', space=vmem, size = 0x40000, scoped, tag = 'input window, operand 3, single buffered']
    #allocation6 [shape = 's32[1]{0}', space=sflag, size = 0x4, scoped, tag = 'scoped memory for pca_forward.1']
    #allocation7 [shape = 'u8[1024]{0}', space=vmem, size = 0x400, scoped, tag = 'output window, operand 0, single buffered']
    %12 = vsyncpa [#allocation3], 0
    %13 = vsyncpa [#allocation6], 0
    %14 = vsyncpa [#allocation4], 0
    // Predicated region
    $region2: #{pca_forward.1} parent=1 // pred_check
      _
    $region3: #{pca_forward.1} parent=1 // pred_check_branch
      %16 = sbr.rel (0) target = $region5
    $region4: #{pca_forward.1} parent=1 // pred_region
      _
    $region5: #{pca_forward.1} parent=1 // pred_fallthru
      _
    // Predicated region
    $region6: #{pca_forward.1} parent=1 // pred_check
      _
    $region7: #{pca_forward.1} parent=1 // pred_check_branch
      %18 = sbr.rel (0) target = $region9
    $region8: #{pca_forward.1} parent=1 // pred_region
      %s20 = ssub.s32 8192, 8192
      %21 = vsyncadd [#allocation3], %s20
      %s22 = sshll.u32 [#allocation2], 4
      %s23 = int_to_ptr.vmem [resolvable:$true] %s22
      %28 = dma.hbm_to_vmem [thread:$0]  %s1, 8192, %s23, [#allocation3], 64, 64, 4
    $region9: #{pca_forward.1} parent=1 // pred_fallthru
      _
    // Predicated region
    $region10: #{pca_forward.1} parent=1 // pred_check
      _
    $region11: #{pca_forward.1} parent=1 // pred_check_branch
      %30 = sbr.rel (0) target = $region13
    $region12: #{pca_forward.1} parent=1 // pred_region
      _
    $region13: #{pca_forward.1} parent=1 // pred_fallthru
      _
    // Predicated region
    $region14: #{pca_forward.1} parent=1 // pred_check
      _
    $region15: #{pca_forward.1} parent=1 // pred_check_branch
      %32 = sbr.rel (0) target = $region17
    $region16: #{pca_forward.1} parent=1 // pred_region
      %s34 = ssub.s32 8192, 8192
      %35 = vsyncadd [#allocation6], %s34
      %s36 = sshll.u32 [#allocation5], 4
      %s37 = int_to_ptr.vmem [resolvable:$true] %s36
      %42 = dma.hbm_to_vmem [thread:$0]  %s3, 8192, %s37, [#allocation6], 512, 512, 32
    $region17: #{pca_forward.1} parent=1 // pred_fallthru
      _
    // Predicated region
    $region18: #{pca_forward.1} parent=1 // pred_check
      _
    $region19: #{pca_forward.1} parent=1 // pred_check_branch
      %44 = sbr.rel (0) target = $region21
    $region20: #{pca_forward.1} parent=1 // pred_region
      _
    $region21: #{pca_forward.1} parent=1 // pred_fallthru
      _
    // Predicated region
    $region22: #{pca_forward.1} parent=1 // pred_check
      _
    $region23: #{pca_forward.1} parent=1 // pred_check_branch
      %46 = sbr.rel (0) target = $region25
    $region24: #{pca_forward.1} parent=1 // pred_region
      %47 = dma.done [#allocation3], 8192
    $region25: #{pca_forward.1} parent=1 // pred_fallthru
      _
    // Predicated region
    $region26: #{pca_forward.1} parent=1 // pred_check
      _
    $region27: #{pca_forward.1} parent=1 // pred_check_branch
      %49 = sbr.rel (0) target = $region29
    $region28: #{pca_forward.1} parent=1 // pred_region
      %50 = dma.done [#allocation6], 8192
    $region29: #{pca_forward.1} parent=1 // pred_fallthru
      _
    %v52 = vld [vmem:[%s0] sm:$0xff]
    %v53 = vld [vmem:[%s0 + $0x8] sm:$0xff]
    %v56 = vcombine.high %v52, %v52
    %v58 = vunpack.c.l.s4 1983009808
    %v59 = vunpack.c.0.s8 %v58
    %v60 = vlaneseq
    %v61 = vshrl.u32 %v60, 7
    %v62 = vsub.s32 %v59, %v61
    %v63 = vrot.slane %v52, %v62
    %v65 = vunpack.c.l.s4 1983009808
    %v66 = vunpack.c.0.s8 %v65
    %v67 = vlaneseq
    %v68 = vshrl.u32 %v67, 7
    %v69 = vsub.s32 %v66, %v68
    %v70 = vrot.slane %v56, %v69
    %v71 = vcombine.high %v63, %v63
    %v72 = vcombine.high %v70, %v70
    %v73 = vcombine.high %v53, %v53
    %v75 = vunpack.c.l.s4 1983009808
    %v76 = vunpack.c.0.s8 %v75
    %v77 = vlaneseq
    %v78 = vshrl.u32 %v77, 7
    %v79 = vsub.s32 %v76, %v78
    %v80 = vrot.slane %v53, %v79
    %v82 = vunpack.c.l.s4 1983009808
    %v83 = vunpack.c.0.s8 %v82
    %v84 = vlaneseq
    %v85 = vshrl.u32 %v84, 7
    %v86 = vsub.s32 %v83, %v85
    %v87 = vrot.slane %v73, %v86
    %v88 = vcombine.high %v80, %v80
    %v89 = vcombine.high %v87, %v87
    %v98 = vpack.c.bf16 %v63, %v63
    %v99 = vpack.c.bf16 %v71, %v71
    %v100 = vpack.c.bf16 %v70, %v70
    %v101 = vpack.c.bf16 %v72, %v72
    %v102 = vpack.c.bf16 %v80, %v80
    %v103 = vpack.c.bf16 %v88, %v88
    %v104 = vpack.c.bf16 %v87, %v87
    %v105 = vpack.c.bf16 %v89, %v89
    %v106 = vld [vmem:[#allocation2] sm:$0xf]
    %v107 = vld [vmem:[#allocation2 + $0x4] sm:$0xf]
    %v108 = vld [vmem:[#allocation2 + $0x8] sm:$0xf]
    %v109 = vld [vmem:[#allocation2 + $0xc] sm:$0xf]
    %v110 = vld [vmem:[#allocation2 + $0x10] sm:$0xf]
    %v111 = vld [vmem:[#allocation2 + $0x14] sm:$0xf]
    %v112 = vld [vmem:[#allocation2 + $0x18] sm:$0xf]
    %v113 = vld [vmem:[#allocation2 + $0x1c] sm:$0xf]
    %v114 = vld [vmem:[#allocation2 + $0x20] sm:$0xf]
    %v115 = vld [vmem:[#allocation2 + $0x24] sm:$0xf]
    %v116 = vld [vmem:[#allocation2 + $0x28] sm:$0xf]
    %v117 = vld [vmem:[#allocation2 + $0x2c] sm:$0xf]
    %v118 = vld [vmem:[#allocation2 + $0x30] sm:$0xf]
    %v119 = vld [vmem:[#allocation2 + $0x34] sm:$0xf]
    %v120 = vld [vmem:[#allocation2 + $0x38] sm:$0xf]
    %v121 = vld [vmem:[#allocation2 + $0x3c] sm:$0xf]
    %v122 = vld [vmem:[#allocation2 + $0x40] sm:$0xf]
    %v123 = vld [vmem:[#allocation2 + $0x44] sm:$0xf]
    %v124 = vld [vmem:[#allocation2 + $0x48] sm:$0xf]
    %v125 = vld [vmem:[#allocation2 + $0x4c] sm:$0xf]
    %v126 = vld [vmem:[#allocation2 + $0x50] sm:$0xf]
    %v127 = vld [vmem:[#allocation2 + $0x54] sm:$0xf]
    %v128 = vld [vmem:[#allocation2 + $0x58] sm:$0xf]
    %v129 = vld [vmem:[#allocation2 + $0x5c] sm:$0xf]
    %v130 = vld [vmem:[#allocation2 + $0x60] sm:$0xf]
    %v131 = vld [vmem:[#allocation2 + $0x64] sm:$0xf]
    %v132 = vld [vmem:[#allocation2 + $0x68] sm:$0xf]
    %v133 = vld [vmem:[#allocation2 + $0x6c] sm:$0xf]
    %v134 = vld [vmem:[#allocation2 + $0x70] sm:$0xf]
    %v135 = vld [vmem:[#allocation2 + $0x74] sm:$0xf]
    %v136 = vld [vmem:[#allocation2 + $0x78] sm:$0xf]
    %v137 = vld [vmem:[#allocation2 + $0x7c] sm:$0xf]
    %v138 = vld [vmem:[#allocation2 + $0x80] sm:$0xf]
    %v139 = vld [vmem:[#allocation2 + $0x84] sm:$0xf]
    %v140 = vld [vmem:[#allocation2 + $0x88] sm:$0xf]
    %v141 = vld [vmem:[#allocation2 + $0x8c] sm:$0xf]
    %v142 = vld [vmem:[#allocation2 + $0x90] sm:$0xf]
    %v143 = vld [vmem:[#allocation2 + $0x94] sm:$0xf]
    %v144 = vld [vmem:[#allocation2 + $0x98] sm:$0xf]
    %v145 = vld [vmem:[#allocation2 + $0x9c] sm:$0xf]
    %v146 = vld [vmem:[#allocation2 + $0xa0] sm:$0xf]
    %v147 = vld [vmem:[#allocation2 + $0xa4] sm:$0xf]
    %v148 = vld [vmem:[#allocation2 + $0xa8] sm:$0xf]
    %v149 = vld [vmem:[#allocation2 + $0xac] sm:$0xf]
    %v150 = vld [vmem:[#allocation2 + $0xb0] sm:$0xf]
    %v151 = vld [vmem:[#allocation2 + $0xb4] sm:$0xf]
    %v152 = vld [vmem:[#allocation2 + $0xb8] sm:$0xf]
    %v153 = vld [vmem:[#allocation2 + $0xbc] sm:$0xf]
    %v154 = vld [vmem:[#allocation2 + $0xc0] sm:$0xf]
    %v155 = vld [vmem:[#allocation2 + $0xc4] sm:$0xf]
    %v156 = vld [vmem:[#allocation2 + $0xc8] sm:$0xf]
    %v157 = vld [vmem:[#allocation2 + $0xcc] sm:$0xf]
    %v158 = vld [vmem:[#allocation2 + $0xd0] sm:$0xf]
    %v159 = vld [vmem:[#allocation2 + $0xd4] sm:$0xf]
    %v160 = vld [vmem:[#allocation2 + $0xd8] sm:$0xf]
    %v161 = vld [vmem:[#allocation2 + $0xdc] sm:$0xf]
    %v162 = vld [vmem:[#allocation2 + $0xe0] sm:$0xf]
    %v163 = vld [vmem:[#allocation2 + $0xe4] sm:$0xf]
    %v164 = vld [vmem:[#allocation2 + $0xe8] sm:$0xf]
    %v165 = vld [vmem:[#allocation2 + $0xec] sm:$0xf]
    %v166 = vld [vmem:[#allocation2 + $0xf0] sm:$0xf]
    %v167 = vld [vmem:[#allocation2 + $0xf4] sm:$0xf]
    %v168 = vld [vmem:[#allocation2 + $0xf8] sm:$0xf]
    %v169 = vld [vmem:[#allocation2 + $0xfc] sm:$0xf]
    %v170 = vld [vmem:[#allocation2 + $0x100] sm:$0xf]
    %v171 = vld [vmem:[#allocation2 + $0x104] sm:$0xf]
    %v172 = vld [vmem:[#allocation2 + $0x108] sm:$0xf]
    %v173 = vld [vmem:[#allocation2 + $0x10c] sm:$0xf]
    %v174 = vld [vmem:[#allocation2 + $0x110] sm:$0xf]
    %v175 = vld [vmem:[#allocation2 + $0x114] sm:$0xf]
    %v176 = vld [vmem:[#allocation2 + $0x118] sm:$0xf]
    %v177 = vld [vmem:[#allocation2 + $0x11c] sm:$0xf]
    %v178 = vld [vmem:[#allocation2 + $0x120] sm:$0xf]
    %v179 = vld [vmem:[#allocation2 + $0x124] sm:$0xf]
    %v180 = vld [vmem:[#allocation2 + $0x128] sm:$0xf]
    %v181 = vld [vmem:[#allocation2 + $0x12c] sm:$0xf]
    %v182 = vld [vmem:[#allocation2 + $0x130] sm:$0xf]
    %v183 = vld [vmem:[#allocation2 + $0x134] sm:$0xf]
    %v184 = vld [vmem:[#allocation2 + $0x138] sm:$0xf]
    %v185 = vld [vmem:[#allocation2 + $0x13c] sm:$0xf]
    %v186 = vld [vmem:[#allocation2 + $0x140] sm:$0xf]
    %v187 = vld [vmem:[#allocation2 + $0x144] sm:$0xf]
    %v188 = vld [vmem:[#allocation2 + $0x148] sm:$0xf]
    %v189 = vld [vmem:[#allocation2 + $0x14c] sm:$0xf]
    %v190 = vld [vmem:[#allocation2 + $0x150] sm:$0xf]
    %v191 = vld [vmem:[#allocation2 + $0x154] sm:$0xf]
    %v192 = vld [vmem:[#allocation2 + $0x158] sm:$0xf]
    %v193 = vld [vmem:[#allocation2 + $0x15c] sm:$0xf]
    %v194 = vld [vmem:[#allocation2 + $0x160] sm:$0xf]
    %v195 = vld [vmem:[#allocation2 + $0x164] sm:$0xf]
    %v196 = vld [vmem:[#allocation2 + $0x168] sm:$0xf]
    %v197 = vld [vmem:[#allocation2 + $0x16c] sm:$0xf]
    %v198 = vld [vmem:[#allocation2 + $0x170] sm:$0xf]
    %v199 = vld [vmem:[#allocation2 + $0x174] sm:$0xf]
    %v200 = vld [vmem:[#allocation2 + $0x178] sm:$0xf]
    %v201 = vld [vmem:[#allocation2 + $0x17c] sm:$0xf]
    %v202 = vld [vmem:[#allocation2 + $0x180] sm:$0xf]
    %v203 = vld [vmem:[#allocation2 + $0x184] sm:$0xf]
    %v204 = vld [vmem:[#allocation2 + $0x188] sm:$0xf]
    %v205 = vld [vmem:[#allocation2 + $0x18c] sm:$0xf]
    %v206 = vld [vmem:[#allocation2 + $0x190] sm:$0xf]
    %v207 = vld [vmem:[#allocation2 + $0x194] sm:$0xf]
    %v208 = vld [vmem:[#allocation2 + $0x198] sm:$0xf]
    %v209 = vld [vmem:[#allocation2 + $0x19c] sm:$0xf]
    %v210 = vld [vmem:[#allocation2 + $0x1a0] sm:$0xf]
    %v211 = vld [vmem:[#allocation2 + $0x1a4] sm:$0xf]
    %v212 = vld [vmem:[#allocation2 + $0x1a8] sm:$0xf]
    %v213 = vld [vmem:[#allocation2 + $0x1ac] sm:$0xf]
    %v214 = vld [vmem:[#allocation2 + $0x1b0] sm:$0xf]
    %v215 = vld [vmem:[#allocation2 + $0x1b4] sm:$0xf]
    %v216 = vld [vmem:[#allocation2 + $0x1b8] sm:$0xf]
    %v217 = vld [vmem:[#allocation2 + $0x1bc] sm:$0xf]
    %v218 = vld [vmem:[#allocation2 + $0x1c0] sm:$0xf]
    %v219 = vld [vmem:[#allocation2 + $0x1c4] sm:$0xf]
    %v220 = vld [vmem:[#allocation2 + $0x1c8] sm:$0xf]
    %v221 = vld [vmem:[#allocation2 + $0x1cc] sm:$0xf]
    %v222 = vld [vmem:[#allocation2 + $0x1d0] sm:$0xf]
    %v223 = vld [vmem:[#allocation2 + $0x1d4] sm:$0xf]
    %v224 = vld [vmem:[#allocation2 + $0x1d8] sm:$0xf]
    %v225 = vld [vmem:[#allocation2 + $0x1dc] sm:$0xf]
    %v226 = vld [vmem:[#allocation2 + $0x1e0] sm:$0xf]
    %v227 = vld [vmem:[#allocation2 + $0x1e4] sm:$0xf]
    %v228 = vld [vmem:[#allocation2 + $0x1e8] sm:$0xf]
    %v229 = vld [vmem:[#allocation2 + $0x1ec] sm:$0xf]
    %v230 = vld [vmem:[#allocation2 + $0x1f0] sm:$0xf]
    %v231 = vld [vmem:[#allocation2 + $0x1f4] sm:$0xf]
    %v232 = vld [vmem:[#allocation2 + $0x1f8] sm:$0xf]
    %v233 = vld [vmem:[#allocation2 + $0x1fc] sm:$0xf]
    %v234 = vld [vmem:[%s2] sm:$0x1]
    %v236 = vlaneseq
    %v237 = vshrl.u32 %v236, 7
    %v238 = vsub.s32 0, %v237
    %v239 = vrot.slane %v234, %v238
    %v369 = vunpack.c.l.b16 %v106
    %v370 = vunpack.c.l.b16 %v107
    %v371 = vunpack.c.l.b16 %v108
    %v372 = vunpack.c.l.b16 %v109
    %v373 = vunpack.c.l.b16 %v110
    %v374 = vunpack.c.l.b16 %v111
    %v375 = vunpack.c.l.b16 %v112
    %v376 = vunpack.c.l.b16 %v113
    %v377 = vunpack.c.l.b16 %v114
    %v378 = vunpack.c.l.b16 %v115
    %v379 = vunpack.c.l.b16 %v116
    %v380 = vunpack.c.l.b16 %v117
    %v381 = vunpack.c.l.b16 %v118
    %v382 = vunpack.c.l.b16 %v119
    %v383 = vunpack.c.l.b16 %v120
    %v384 = vunpack.c.l.b16 %v121
    %v385 = vunpack.c.l.b16 %v122
    %v386 = vunpack.c.l.b16 %v123
    %v387 = vunpack.c.l.b16 %v124
    %v388 = vunpack.c.l.b16 %v125
    %v389 = vunpack.c.l.b16 %v126
    %v390 = vunpack.c.l.b16 %v127
    %v391 = vunpack.c.l.b16 %v128
    %v392 = vunpack.c.l.b16 %v129
    %v393 = vunpack.c.l.b16 %v130
    %v394 = vunpack.c.l.b16 %v131
    %v395 = vunpack.c.l.b16 %v132
    %v396 = vunpack.c.l.b16 %v133
    %v397 = vunpack.c.l.b16 %v134
    %v398 = vunpack.c.l.b16 %v135
    %v399 = vunpack.c.l.b16 %v136
    %v400 = vunpack.c.l.b16 %v137
    %v401 = vunpack.c.l.b16 %v138
    %v402 = vunpack.c.l.b16 %v139
    %v403 = vunpack.c.l.b16 %v140
    %v404 = vunpack.c.l.b16 %v141
    %v405 = vunpack.c.l.b16 %v142
    %v406 = vunpack.c.l.b16 %v143
    %v407 = vunpack.c.l.b16 %v144
    %v408 = vunpack.c.l.b16 %v145
    %v409 = vunpack.c.l.b16 %v146
    %v410 = vunpack.c.l.b16 %v147
    %v411 = vunpack.c.l.b16 %v148
    %v412 = vunpack.c.l.b16 %v149
    %v413 = vunpack.c.l.b16 %v150
    %v414 = vunpack.c.l.b16 %v151
    %v415 = vunpack.c.l.b16 %v152
    %v416 = vunpack.c.l.b16 %v153
    %v417 = vunpack.c.l.b16 %v154
    %v418 = vunpack.c.l.b16 %v155
    %v419 = vunpack.c.l.b16 %v156
    %v420 = vunpack.c.l.b16 %v157
    %v421 = vunpack.c.l.b16 %v158
    %v422 = vunpack.c.l.b16 %v159
    %v423 = vunpack.c.l.b16 %v160
    %v424 = vunpack.c.l.b16 %v161
    %v425 = vunpack.c.l.b16 %v162
    %v426 = vunpack.c.l.b16 %v163
    %v427 = vunpack.c.l.b16 %v164
    %v428 = vunpack.c.l.b16 %v165
    %v429 = vunpack.c.l.b16 %v166
    %v430 = vunpack.c.l.b16 %v167
    %v431 = vunpack.c.l.b16 %v168
    %v432 = vunpack.c.l.b16 %v169
    %v433 = vunpack.c.l.b16 %v170
    %v434 = vunpack.c.l.b16 %v171
    %v435 = vunpack.c.l.b16 %v172
    %v436 = vunpack.c.l.b16 %v173
    %v437 = vunpack.c.l.b16 %v174
    %v438 = vunpack.c.l.b16 %v175
    %v439 = vunpack.c.l.b16 %v176
    %v440 = vunpack.c.l.b16 %v177
    %v441 = vunpack.c.l.b16 %v178
    %v442 = vunpack.c.l.b16 %v179
    %v443 = vunpack.c.l.b16 %v180
    %v444 = vunpack.c.l.b16 %v181
    %v445 = vunpack.c.l.b16 %v182
    %v446 = vunpack.c.l.b16 %v183
    %v447 = vunpack.c.l.b16 %v184
    %v448 = vunpack.c.l.b16 %v185
    %v449 = vunpack.c.l.b16 %v186
    %v450 = vunpack.c.l.b16 %v187
    %v451 = vunpack.c.l.b16 %v188
    %v452 = vunpack.c.l.b16 %v189
    %v453 = vunpack.c.l.b16 %v190
    %v454 = vunpack.c.l.b16 %v191
    %v455 = vunpack.c.l.b16 %v192
    %v456 = vunpack.c.l.b16 %v193
    %v457 = vunpack.c.l.b16 %v194
    %v458 = vunpack.c.l.b16 %v195
    %v459 = vunpack.c.l.b16 %v196
    %v460 = vunpack.c.l.b16 %v197
    %v461 = vunpack.c.l.b16 %v198
    %v462 = vunpack.c.l.b16 %v199
    %v463 = vunpack.c.l.b16 %v200
    %v464 = vunpack.c.l.b16 %v201
    %v465 = vunpack.c.l.b16 %v202
    %v466 = vunpack.c.l.b16 %v203
    %v467 = vunpack.c.l.b16 %v204
    %v468 = vunpack.c.l.b16 %v205
    %v469 = vunpack.c.l.b16 %v206
    %v470 = vunpack.c.l.b16 %v207
    %v471 = vunpack.c.l.b16 %v208
    %v472 = vunpack.c.l.b16 %v209
    %v473 = vunpack.c.l.b16 %v210
    %v474 = vunpack.c.l.b16 %v211
    %v475 = vunpack.c.l.b16 %v212
    %v476 = vunpack.c.l.b16 %v213
    %v477 = vunpack.c.l.b16 %v214
    %v478 = vunpack.c.l.b16 %v215
    %v479 = vunpack.c.l.b16 %v216
    %v480 = vunpack.c.l.b16 %v217
    %v481 = vunpack.c.l.b16 %v218
    %v482 = vunpack.c.l.b16 %v219
    %v483 = vunpack.c.l.b16 %v220
    %v484 = vunpack.c.l.b16 %v221
    %v485 = vunpack.c.l.b16 %v222
    %v486 = vunpack.c.l.b16 %v223
    %v487 = vunpack.c.l.b16 %v224
    %v488 = vunpack.c.l.b16 %v225
    %v489 = vunpack.c.l.b16 %v226
    %v490 = vunpack.c.l.b16 %v227
    %v491 = vunpack.c.l.b16 %v228
    %v492 = vunpack.c.l.b16 %v229
    %v493 = vunpack.c.l.b16 %v230
    %v494 = vunpack.c.l.b16 %v231
    %v495 = vunpack.c.l.b16 %v232
    %v496 = vunpack.c.l.b16 %v233
    %v497 = vpack.c.b16 %v370, %v369
    %v498 = vpack.c.b16 %v372, %v371
    %v499 = vpack.c.b16 %v374, %v373
    %v500 = vpack.c.b16 %v376, %v375
    %v501 = vpack.c.b16 %v378, %v377
    %v502 = vpack.c.b16 %v380, %v379
    %v503 = vpack.c.b16 %v382, %v381
    %v504 = vpack.c.b16 %v384, %v383
    %v505 = vpack.c.b16 %v386, %v385
    %v506 = vpack.c.b16 %v388, %v387
    %v507 = vpack.c.b16 %v390, %v389
    %v508 = vpack.c.b16 %v392, %v391
    %v509 = vpack.c.b16 %v394, %v393
    %v510 = vpack.c.b16 %v396, %v395
    %v511 = vpack.c.b16 %v398, %v397
    %v512 = vpack.c.b16 %v400, %v399
    %v513 = vpack.c.b16 %v402, %v401
    %v514 = vpack.c.b16 %v404, %v403
    %v515 = vpack.c.b16 %v406, %v405
    %v516 = vpack.c.b16 %v408, %v407
    %v517 = vpack.c.b16 %v410, %v409
    %v518 = vpack.c.b16 %v412, %v411
    %v519 = vpack.c.b16 %v414, %v413
    %v520 = vpack.c.b16 %v416, %v415
    %v521 = vpack.c.b16 %v418, %v417
    %v522 = vpack.c.b16 %v420, %v419
    %v523 = vpack.c.b16 %v422, %v421
    %v524 = vpack.c.b16 %v424, %v423
    %v525 = vpack.c.b16 %v426, %v425
    %v526 = vpack.c.b16 %v428, %v427
    %v527 = vpack.c.b16 %v430, %v429
    %v528 = vpack.c.b16 %v432, %v431
    %v529 = vpack.c.b16 %v434, %v433
    %v530 = vpack.c.b16 %v436, %v435
    %v531 = vpack.c.b16 %v438, %v437
    %v532 = vpack.c.b16 %v440, %v439
    %v533 = vpack.c.b16 %v442, %v441
    %v534 = vpack.c.b16 %v444, %v443
    %v535 = vpack.c.b16 %v446, %v445
    %v536 = vpack.c.b16 %v448, %v447
    %v537 = vpack.c.b16 %v450, %v449
    %v538 = vpack.c.b16 %v452, %v451
    %v539 = vpack.c.b16 %v454, %v453
    %v540 = vpack.c.b16 %v456, %v455
    %v541 = vpack.c.b16 %v458, %v457
    %v542 = vpack.c.b16 %v460, %v459
    %v543 = vpack.c.b16 %v462, %v461
    %v544 = vpack.c.b16 %v464, %v463
    %v545 = vpack.c.b16 %v466, %v465
    %v546 = vpack.c.b16 %v468, %v467
    %v547 = vpack.c.b16 %v470, %v469
    %v548 = vpack.c.b16 %v472, %v471
    %v549 = vpack.c.b16 %v474, %v473
    %v550 = vpack.c.b16 %v476, %v475
    %v551 = vpack.c.b16 %v478, %v477
    %v552 = vpack.c.b16 %v480, %v479
    %v553 = vpack.c.b16 %v482, %v481
    %v554 = vpack.c.b16 %v484, %v483
    %v555 = vpack.c.b16 %v486, %v485
    %v556 = vpack.c.b16 %v488, %v487
    %v557 = vpack.c.b16 %v490, %v489
    %v558 = vpack.c.b16 %v492, %v491
    %v559 = vpack.c.b16 %v494, %v493
    %v560 = vpack.c.b16 %v496, %v495
    %625 = vmatprep.subr.bf16.mxu0 0
    %626 = vmatpush1.bf16.msra.mxu0 %v504
    %627 = vmatprep.subr.bf16.mxu0 0
    %628 = vmatpush1.bf16.msra.mxu0 %v503
    %629 = vmatprep.subr.bf16.mxu0 0
    %630 = vmatpush1.bf16.msra.mxu0 %v502
    %631 = vmatprep.subr.bf16.mxu0 0
    %632 = vmatpush1.bf16.msra.mxu0 %v501
    %633 = vmatprep.subr.bf16.mxu0 0
    %634 = vmatpush1.bf16.msra.mxu0 %v500
    %635 = vmatprep.subr.bf16.mxu0 0
    %636 = vmatpush1.bf16.msra.mxu0 %v499
    %637 = vmatprep.subr.bf16.mxu0 0
    %638 = vmatpush1.bf16.msra.mxu0 %v498
    %639 = vmatprep.subr.bf16.mxu0 0
    %640 = vmatpush1.bf16.msra.mxu0 %v497
    %641 = vmatprep.subr.bf16.mxu0 0
    %642 = vmatpush2.bf16.msra.mxu0 %v512
    %643 = vmatprep.subr.bf16.mxu0 0
    %644 = vmatpush2.bf16.msra.mxu0 %v511
    %645 = vmatprep.subr.bf16.mxu0 0
    %646 = vmatpush2.bf16.msra.mxu0 %v510
    %647 = vmatprep.subr.bf16.mxu0 0
    %648 = vmatpush2.bf16.msra.mxu0 %v509
    %649 = vmatprep.subr.bf16.mxu0 0
    %650 = vmatpush2.bf16.msra.mxu0 %v508
    %651 = vmatprep.subr.bf16.mxu0 0
    %652 = vmatpush2.bf16.msra.mxu0 %v507
    %653 = vmatprep.subr.bf16.mxu0 0
    %654 = vmatpush2.bf16.msra.mxu0 %v506
    %655 = vmatprep.subr.bf16.mxu0 0
    %656 = vmatpush2.bf16.msra.mxu0 %v505
    %657 = vmatprep.mubr.bf16.mxu0 %v99
    %658 = vmatmul.mubr.bf16.gmra.mxu0 %v98
    %v659 = vpop.f32.mrf.mxu0
    %v660 = vadd.f32 %v239, %v659
    %v661 = vpop.f32.mrf.mxu0
    %v662 = vpop.f32.mrf.mxu0
    %v663 = vpop.f32.mrf.mxu0
    %664 = vdwg.mxu0
    %665 = vmatprep.subr.bf16.mxu0 0
    %666 = vmatpush1.bf16.msra.mxu0 %v520
    %667 = vmatprep.subr.bf16.mxu0 0
    %668 = vmatpush1.bf16.msra.mxu0 %v519
    %669 = vmatprep.subr.bf16.mxu0 0
    %670 = vmatpush1.bf16.msra.mxu0 %v518
    %671 = vmatprep.subr.bf16.mxu0 0
    %672 = vmatpush1.bf16.msra.mxu0 %v517
    %673 = vmatprep.subr.bf16.mxu0 0
    %674 = vmatpush1.bf16.msra.mxu0 %v516
    %675 = vmatprep.subr.bf16.mxu0 0
    %676 = vmatpush1.bf16.msra.mxu0 %v515
    %677 = vmatprep.subr.bf16.mxu0 0
    %678 = vmatpush1.bf16.msra.mxu0 %v514
    %679 = vmatprep.subr.bf16.mxu0 0
    %680 = vmatpush1.bf16.msra.mxu0 %v513
    %681 = vmatprep.subr.bf16.mxu0 0
    %682 = vmatpush2.bf16.msra.mxu0 %v528
    %683 = vmatprep.subr.bf16.mxu0 0
    %684 = vmatpush2.bf16.msra.mxu0 %v527
    %685 = vmatprep.subr.bf16.mxu0 0
    %686 = vmatpush2.bf16.msra.mxu0 %v526
    %687 = vmatprep.subr.bf16.mxu0 0
    %688 = vmatpush2.bf16.msra.mxu0 %v525
    %689 = vmatprep.subr.bf16.mxu0 0
    %690 = vmatpush2.bf16.msra.mxu0 %v524
    %691 = vmatprep.subr.bf16.mxu0 0
    %692 = vmatpush2.bf16.msra.mxu0 %v523
    %693 = vmatprep.subr.bf16.mxu0 0
    %694 = vmatpush2.bf16.msra.mxu0 %v522
    %695 = vmatprep.subr.bf16.mxu0 0
    %696 = vmatpush2.bf16.msra.mxu0 %v521
    %697 = vmatprep.mubr.bf16.mxu0 %v101
    %698 = vmatmul.mubr.bf16.gmra.mxu0 %v100
    %v699 = vpop.f32.mrf.mxu0
    %v700 = vadd.f32 %v660, %v699
    %v701 = vpop.f32.mrf.mxu0
    %v702 = vpop.f32.mrf.mxu0
    %v703 = vpop.f32.mrf.mxu0
    %704 = vdwg.mxu0
    %705 = vmatprep.subr.bf16.mxu0 0
    %706 = vmatpush1.bf16.msra.mxu0 %v536
    %707 = vmatprep.subr.bf16.mxu0 0
    %708 = vmatpush1.bf16.msra.mxu0 %v535
    %709 = vmatprep.subr.bf16.mxu0 0
    %710 = vmatpush1.bf16.msra.mxu0 %v534
    %711 = vmatprep.subr.bf16.mxu0 0
    %712 = vmatpush1.bf16.msra.mxu0 %v533
    %713 = vmatprep.subr.bf16.mxu0 0
    %714 = vmatpush1.bf16.msra.mxu0 %v532
    %715 = vmatprep.subr.bf16.mxu0 0
    %716 = vmatpush1.bf16.msra.mxu0 %v531
    %717 = vmatprep.subr.bf16.mxu0 0
    %718 = vmatpush1.bf16.msra.mxu0 %v530
    %719 = vmatprep.subr.bf16.mxu0 0
    %720 = vmatpush1.bf16.msra.mxu0 %v529
    %721 = vmatprep.subr.bf16.mxu0 0
    %722 = vmatpush2.bf16.msra.mxu0 %v544
    %723 = vmatprep.subr.bf16.mxu0 0
    %724 = vmatpush2.bf16.msra.mxu0 %v543
    %725 = vmatprep.subr.bf16.mxu0 0
    %726 = vmatpush2.bf16.msra.mxu0 %v542
    %727 = vmatprep.subr.bf16.mxu0 0
    %728 = vmatpush2.bf16.msra.mxu0 %v541
    %729 = vmatprep.subr.bf16.mxu0 0
    %730 = vmatpush2.bf16.msra.mxu0 %v540
    %731 = vmatprep.subr.bf16.mxu0 0
    %732 = vmatpush2.bf16.msra.mxu0 %v539
    %733 = vmatprep.subr.bf16.mxu0 0
    %734 = vmatpush2.bf16.msra.mxu0 %v538
    %735 = vmatprep.subr.bf16.mxu0 0
    %736 = vmatpush2.bf16.msra.mxu0 %v537
    %737 = vmatprep.mubr.bf16.mxu0 %v103
    %738 = vmatmul.mubr.bf16.gmra.mxu0 %v102
    %v739 = vpop.f32.mrf.mxu0
    %v740 = vadd.f32 %v700, %v739
    %v741 = vpop.f32.mrf.mxu0
    %v742 = vpop.f32.mrf.mxu0
    %v743 = vpop.f32.mrf.mxu0
    %744 = vdwg.mxu0
    %745 = vmatprep.subr.bf16.mxu0 0
    %746 = vmatpush1.bf16.msra.mxu0 %v552
    %747 = vmatprep.subr.bf16.mxu0 0
    %748 = vmatpush1.bf16.msra.mxu0 %v551
    %749 = vmatprep.subr.bf16.mxu0 0
    %750 = vmatpush1.bf16.msra.mxu0 %v550
    %751 = vmatprep.subr.bf16.mxu0 0
    %752 = vmatpush1.bf16.msra.mxu0 %v549
    %753 = vmatprep.subr.bf16.mxu0 0
    %754 = vmatpush1.bf16.msra.mxu0 %v548
    %755 = vmatprep.subr.bf16.mxu0 0
    %756 = vmatpush1.bf16.msra.mxu0 %v547
    %757 = vmatprep.subr.bf16.mxu0 0
    %758 = vmatpush1.bf16.msra.mxu0 %v546
    %759 = vmatprep.subr.bf16.mxu0 0
    %760 = vmatpush1.bf16.msra.mxu0 %v545
    %761 = vmatprep.subr.bf16.mxu0 0
    %762 = vmatpush2.bf16.msra.mxu0 %v560
    %763 = vmatprep.subr.bf16.mxu0 0
    %764 = vmatpush2.bf16.msra.mxu0 %v559
    %765 = vmatprep.subr.bf16.mxu0 0
    %766 = vmatpush2.bf16.msra.mxu0 %v558
    %767 = vmatprep.subr.bf16.mxu0 0
    %768 = vmatpush2.bf16.msra.mxu0 %v557
    %769 = vmatprep.subr.bf16.mxu0 0
    %770 = vmatpush2.bf16.msra.mxu0 %v556
    %771 = vmatprep.subr.bf16.mxu0 0
    %772 = vmatpush2.bf16.msra.mxu0 %v555
    %773 = vmatprep.subr.bf16.mxu0 0
    %774 = vmatpush2.bf16.msra.mxu0 %v554
    %775 = vmatprep.subr.bf16.mxu0 0
    %776 = vmatpush2.bf16.msra.mxu0 %v553
    %777 = vmatprep.mubr.bf16.mxu0 %v105
    %778 = vmatmul.mubr.bf16.gmra.mxu0 %v104
    %v779 = vpop.f32.mrf.mxu0
    %v780 = vadd.f32 %v740, %v779
    %v781 = vpop.f32.mrf.mxu0
    %v782 = vpop.f32.mrf.mxu0
    %v783 = vpop.f32.mrf.mxu0
    %784 = vdwg.mxu0
    %785 = vst [vmem:[#allocation7] sm:$0x3] %v780
    %v786 = vpack.c.bf16 %v780, %v780
    %v787 = vld [vmem:[#allocation5] sm:$0xff]
    %v788 = vld [vmem:[#allocation5 + $0x8] sm:$0xff]
    %v789 = vld [vmem:[#allocation5 + $0x10] sm:$0xff]
    %v790 = vld [vmem:[#allocation5 + $0x18] sm:$0xff]
    %v791 = vld [vmem:[#allocation5 + $0x20] sm:$0xff]
    %v792 = vld [vmem:[#allocation5 + $0x28] sm:$0xff]
    %v793 = vld [vmem:[#allocation5 + $0x30] sm:$0xff]
    %v794 = vld [vmem:[#allocation5 + $0x38] sm:$0xff]
    %v795 = vld [vmem:[#allocation5 + $0x40] sm:$0xff]
    %v796 = vld [vmem:[#allocation5 + $0x48] sm:$0xff]
    %v797 = vld [vmem:[#allocation5 + $0x50] sm:$0xff]
    %v798 = vld [vmem:[#allocation5 + $0x58] sm:$0xff]
    %v799 = vld [vmem:[#allocation5 + $0x60] sm:$0xff]
    %v800 = vld [vmem:[#allocation5 + $0x68] sm:$0xff]
    %v801 = vld [vmem:[#allocation5 + $0x70] sm:$0xff]
    %v802 = vld [vmem:[#allocation5 + $0x78] sm:$0xff]
    %v803 = vld [vmem:[#allocation5 + $0x80] sm:$0xff]
    %v804 = vld [vmem:[#allocation5 + $0x88] sm:$0xff]
    %v805 = vld [vmem:[#allocation5 + $0x90] sm:$0xff]
    %v806 = vld [vmem:[#allocation5 + $0x98] sm:$0xff]
    %v807 = vld [vmem:[#allocation5 + $0xa0] sm:$0xff]
    %v808 = vld [vmem:[#allocation5 + $0xa8] sm:$0xff]
    %v809 = vld [vmem:[#allocation5 + $0xb0] sm:$0xff]
    %v810 = vld [vmem:[#allocation5 + $0xb8] sm:$0xff]
    %v811 = vld [vmem:[#allocation5 + $0xc0] sm:$0xff]
    %v812 = vld [vmem:[#allocation5 + $0xc8] sm:$0xff]
    %v813 = vld [vmem:[#allocation5 + $0xd0] sm:$0xff]
    %v814 = vld [vmem:[#allocation5 + $0xd8] sm:$0xff]
    %v815 = vld [vmem:[#allocation5 + $0xe0] sm:$0xff]
    %v816 = vld [vmem:[#allocation5 + $0xe8] sm:$0xff]
    %v817 = vld [vmem:[#allocation5 + $0xf0] sm:$0xff]
    %v818 = vld [vmem:[#allocation5 + $0xf8] sm:$0xff]
    %v819 = vld [vmem:[#allocation5 + $0x100] sm:$0xff]
    %v820 = vld [vmem:[#allocation5 + $0x108] sm:$0xff]
    %v821 = vld [vmem:[#allocation5 + $0x110] sm:$0xff]
    %v822 = vld [vmem:[#allocation5 + $0x118] sm:$0xff]
    %v823 = vld [vmem:[#allocation5 + $0x120] sm:$0xff]
    %v824 = vld [vmem:[#allocation5 + $0x128] sm:$0xff]
    %v825 = vld [vmem:[#allocation5 + $0x130] sm:$0xff]
    %v826 = vld [vmem:[#allocation5 + $0x138] sm:$0xff]
    %v827 = vld [vmem:[#allocation5 + $0x140] sm:$0xff]
    %v828 = vld [vmem:[#allocation5 + $0x148] sm:$0xff]
    %v829 = vld [vmem:[#allocation5 + $0x150] sm:$0xff]
    %v830 = vld [vmem:[#allocation5 + $0x158] sm:$0xff]
    %v831 = vld [vmem:[#allocation5 + $0x160] sm:$0xff]
    %v832 = vld [vmem:[#allocation5 + $0x168] sm:$0xff]
    %v833 = vld [vmem:[#allocation5 + $0x170] sm:$0xff]
    %v834 = vld [vmem:[#allocation5 + $0x178] sm:$0xff]
    %v835 = vld [vmem:[#allocation5 + $0x180] sm:$0xff]
    %v836 = vld [vmem:[#allocation5 + $0x188] sm:$0xff]
    %v837 = vld [vmem:[#allocation5 + $0x190] sm:$0xff]
    %v838 = vld [vmem:[#allocation5 + $0x198] sm:$0xff]
    %v839 = vld [vmem:[#allocation5 + $0x1a0] sm:$0xff]
    %v840 = vld [vmem:[#allocation5 + $0x1a8] sm:$0xff]
    %v841 = vld [vmem:[#allocation5 + $0x1b0] sm:$0xff]
    %v842 = vld [vmem:[#allocation5 + $0x1b8] sm:$0xff]
    %v843 = vld [vmem:[#allocation5 + $0x1c0] sm:$0xff]
    %v844 = vld [vmem:[#allocation5 + $0x1c8] sm:$0xff]
    %v845 = vld [vmem:[#allocation5 + $0x1d0] sm:$0xff]
    %v846 = vld [vmem:[#allocation5 + $0x1d8] sm:$0xff]
    %v847 = vld [vmem:[#allocation5 + $0x1e0] sm:$0xff]
    %v848 = vld [vmem:[#allocation5 + $0x1e8] sm:$0xff]
    %v849 = vld [vmem:[#allocation5 + $0x1f0] sm:$0xff]
    %v850 = vld [vmem:[#allocation5 + $0x1f8] sm:$0xff]
    %v851 = vld [vmem:[%s4] sm:$0xff]
    %v853 = vlaneseq
    %v854 = vshrl.u32 %v853, 7
    %v855 = vsub.s32 0, %v854
    %v856 = vrot.slane %v851, %v855
    %v857 = vlaneseq
    %v858 = vshrl.u32 %v857, 7
    %v859 = vsub.s32 1, %v858
    %v860 = vrot.slane %v851, %v859
    %v861 = vlaneseq
    %v862 = vshrl.u32 %v861, 7
    %v863 = vsub.s32 2, %v862
    %v864 = vrot.slane %v851, %v863
    %v865 = vlaneseq
    %v866 = vshrl.u32 %v865, 7
    %v867 = vsub.s32 3, %v866
    %v868 = vrot.slane %v851, %v867
    %v869 = vlaneseq
    %v870 = vshrl.u32 %v869, 7
    %v871 = vsub.s32 4, %v870
    %v872 = vrot.slane %v851, %v871
    %v873 = vlaneseq
    %v874 = vshrl.u32 %v873, 7
    %v875 = vsub.s32 5, %v874
    %v876 = vrot.slane %v851, %v875
    %v877 = vlaneseq
    %v878 = vshrl.u32 %v877, 7
    %v879 = vsub.s32 6, %v878
    %v880 = vrot.slane %v851, %v879
    %v881 = vlaneseq
    %v882 = vshrl.u32 %v881, 7
    %v883 = vsub.s32 7, %v882
    %v884 = vrot.slane %v851, %v883
    %v957 = vunpack.c.l.b16 %v787
    %v958 = vunpack.c.h.b16 %v787
    %v959 = vunpack.c.l.b16 %v788
    %v960 = vunpack.c.h.b16 %v788
    %v961 = vunpack.c.l.b16 %v789
    %v962 = vunpack.c.h.b16 %v789
    %v963 = vunpack.c.l.b16 %v790
    %v964 = vunpack.c.h.b16 %v790
    %v965 = vunpack.c.l.b16 %v791
    %v966 = vunpack.c.h.b16 %v791
    %v967 = vunpack.c.l.b16 %v792
    %v968 = vunpack.c.h.b16 %v792
    %v969 = vunpack.c.l.b16 %v793
    %v970 = vunpack.c.h.b16 %v793
    %v971 = vunpack.c.l.b16 %v794
    %v972 = vunpack.c.h.b16 %v794
    %v973 = vunpack.c.l.b16 %v795
    %v974 = vunpack.c.h.b16 %v795
    %v975 = vunpack.c.l.b16 %v796
    %v976 = vunpack.c.h.b16 %v796
    %v977 = vunpack.c.l.b16 %v797
    %v978 = vunpack.c.h.b16 %v797
    %v979 = vunpack.c.l.b16 %v798
    %v980 = vunpack.c.h.b16 %v798
    %v981 = vunpack.c.l.b16 %v799
    %v982 = vunpack.c.h.b16 %v799
    %v983 = vunpack.c.l.b16 %v800
    %v984 = vunpack.c.h.b16 %v800
    %v985 = vunpack.c.l.b16 %v801
    %v986 = vunpack.c.h.b16 %v801
    %v987 = vunpack.c.l.b16 %v802
    %v988 = vunpack.c.h.b16 %v802
    %v989 = vunpack.c.l.b16 %v803
    %v990 = vunpack.c.h.b16 %v803
    %v991 = vunpack.c.l.b16 %v804
    %v992 = vunpack.c.h.b16 %v804
    %v993 = vunpack.c.l.b16 %v805
    %v994 = vunpack.c.h.b16 %v805
    %v995 = vunpack.c.l.b16 %v806
    %v996 = vunpack.c.h.b16 %v806
    %v997 = vunpack.c.l.b16 %v807
    %v998 = vunpack.c.h.b16 %v807
    %v999 = vunpack.c.l.b16 %v808
    %v1000 = vunpack.c.h.b16 %v808
    %v1001 = vunpack.c.l.b16 %v809
    %v1002 = vunpack.c.h.b16 %v809
    %v1003 = vunpack.c.l.b16 %v810
    %v1004 = vunpack.c.h.b16 %v810
    %v1005 = vunpack.c.l.b16 %v811
    %v1006 = vunpack.c.h.b16 %v811
    %v1007 = vunpack.c.l.b16 %v812
    %v1008 = vunpack.c.h.b16 %v812
    %v1009 = vunpack.c.l.b16 %v813
    %v1010 = vunpack.c.h.b16 %v813
    %v1011 = vunpack.c.l.b16 %v814
    %v1012 = vunpack.c.h.b16 %v814
    %v1013 = vunpack.c.l.b16 %v815
    %v1014 = vunpack.c.h.b16 %v815
    %v1015 = vunpack.c.l.b16 %v816
    %v1016 = vunpack.c.h.b16 %v816
    %v1017 = vunpack.c.l.b16 %v817
    %v1018 = vunpack.c.h.b16 %v817
    %v1019 = vunpack.c.l.b16 %v818
    %v1020 = vunpack.c.h.b16 %v818
    %v1021 = vunpack.c.l.b16 %v819
    %v1022 = vunpack.c.h.b16 %v819
    %v1023 = vunpack.c.l.b16 %v820
    %v1024 = vunpack.c.h.b16 %v820
    %v1025 = vunpack.c.l.b16 %v821
    %v1026 = vunpack.c.h.b16 %v821
    %v1027 = vunpack.c.l.b16 %v822
    %v1028 = vunpack.c.h.b16 %v822
    %v1029 = vunpack.c.l.b16 %v823
    %v1030 = vunpack.c.h.b16 %v823
    %v1031 = vunpack.c.l.b16 %v824
    %v1032 = vunpack.c.h.b16 %v824
    %v1033 = vunpack.c.l.b16 %v825
    %v1034 = vunpack.c.h.b16 %v825
    %v1035 = vunpack.c.l.b16 %v826
    %v1036 = vunpack.c.h.b16 %v826
    %v1037 = vunpack.c.l.b16 %v827
    %v1038 = vunpack.c.h.b16 %v827
    %v1039 = vunpack.c.l.b16 %v828
    %v1040 = vunpack.c.h.b16 %v828
    %v1041 = vunpack.c.l.b16 %v829
    %v1042 = vunpack.c.h.b16 %v829
    %v1043 = vunpack.c.l.b16 %v830
    %v1044 = vunpack.c.h.b16 %v830
    %v1045 = vunpack.c.l.b16 %v831
    %v1046 = vunpack.c.h.b16 %v831
    %v1047 = vunpack.c.l.b16 %v832
    %v1048 = vunpack.c.h.b16 %v832
    %v1049 = vunpack.c.l.b16 %v833
    %v1050 = vunpack.c.h.b16 %v833
    %v1051 = vunpack.c.l.b16 %v834
    %v1052 = vunpack.c.h.b16 %v834
    %v1053 = vunpack.c.l.b16 %v835
    %v1054 = vunpack.c.h.b16 %v835
    %v1055 = vunpack.c.l.b16 %v836
    %v1056 = vunpack.c.h.b16 %v836
    %v1057 = vunpack.c.l.b16 %v837
    %v1058 = vunpack.c.h.b16 %v837
    %v1059 = vunpack.c.l.b16 %v838
    %v1060 = vunpack.c.h.b16 %v838
    %v1061 = vunpack.c.l.b16 %v839
    %v1062 = vunpack.c.h.b16 %v839
    %v1063 = vunpack.c.l.b16 %v840
    %v1064 = vunpack.c.h.b16 %v840
    %v1065 = vunpack.c.l.b16 %v841
    %v1066 = vunpack.c.h.b16 %v841
    %v1067 = vunpack.c.l.b16 %v842
    %v1068 = vunpack.c.h.b16 %v842
    %v1069 = vunpack.c.l.b16 %v843
    %v1070 = vunpack.c.h.b16 %v843
    %v1071 = vunpack.c.l.b16 %v844
    %v1072 = vunpack.c.h.b16 %v844
    %v1073 = vunpack.c.l.b16 %v845
    %v1074 = vunpack.c.h.b16 %v845
    %v1075 = vunpack.c.l.b16 %v846
    %v1076 = vunpack.c.h.b16 %v846
    %v1077 = vunpack.c.l.b16 %v847
    %v1078 = vunpack.c.h.b16 %v847
    %v1079 = vunpack.c.l.b16 %v848
    %v1080 = vunpack.c.h.b16 %v848
    %v1081 = vunpack.c.l.b16 %v849
    %v1082 = vunpack.c.h.b16 %v849
    %v1083 = vunpack.c.l.b16 %v850
    %v1084 = vunpack.c.h.b16 %v850
    %v1085 = vpack.c.b16 %v965, %v957
    %v1086 = vpack.c.b16 %v966, %v958
    %v1087 = vpack.c.b16 %v967, %v959
    %v1088 = vpack.c.b16 %v968, %v960
    %v1089 = vpack.c.b16 %v969, %v961
    %v1090 = vpack.c.b16 %v970, %v962
    %v1091 = vpack.c.b16 %v971, %v963
    %v1092 = vpack.c.b16 %v972, %v964
    %v1093 = vpack.c.b16 %v981, %v973
    %v1094 = vpack.c.b16 %v982, %v974
    %v1095 = vpack.c.b16 %v983, %v975
    %v1096 = vpack.c.b16 %v984, %v976
    %v1097 = vpack.c.b16 %v985, %v977
    %v1098 = vpack.c.b16 %v986, %v978
    %v1099 = vpack.c.b16 %v987, %v979
    %v1100 = vpack.c.b16 %v988, %v980
    %v1101 = vpack.c.b16 %v997, %v989
    %v1102 = vpack.c.b16 %v998, %v990
    %v1103 = vpack.c.b16 %v999, %v991
    %v1104 = vpack.c.b16 %v1000, %v992
    %v1105 = vpack.c.b16 %v1001, %v993
    %v1106 = vpack.c.b16 %v1002, %v994
    %v1107 = vpack.c.b16 %v1003, %v995
    %v1108 = vpack.c.b16 %v1004, %v996
    %v1109 = vpack.c.b16 %v1013, %v1005
    %v1110 = vpack.c.b16 %v1014, %v1006
    %v1111 = vpack.c.b16 %v1015, %v1007
    %v1112 = vpack.c.b16 %v1016, %v1008
    %v1113 = vpack.c.b16 %v1017, %v1009
    %v1114 = vpack.c.b16 %v1018, %v1010
    %v1115 = vpack.c.b16 %v1019, %v1011
    %v1116 = vpack.c.b16 %v1020, %v1012
    %v1117 = vpack.c.b16 %v1029, %v1021
    %v1118 = vpack.c.b16 %v1030, %v1022
    %v1119 = vpack.c.b16 %v1031, %v1023
    %v1120 = vpack.c.b16 %v1032, %v1024
    %v1121 = vpack.c.b16 %v1033, %v1025
    %v1122 = vpack.c.b16 %v1034, %v1026
    %v1123 = vpack.c.b16 %v1035, %v1027
    %v1124 = vpack.c.b16 %v1036, %v1028
    %v1125 = vpack.c.b16 %v1045, %v1037
    %v1126 = vpack.c.b16 %v1046, %v1038
    %v1127 = vpack.c.b16 %v1047, %v1039
    %v1128 = vpack.c.b16 %v1048, %v1040
    %v1129 = vpack.c.b16 %v1049, %v1041
    %v1130 = vpack.c.b16 %v1050, %v1042
    %v1131 = vpack.c.b16 %v1051, %v1043
    %v1132 = vpack.c.b16 %v1052, %v1044
    %v1133 = vpack.c.b16 %v1061, %v1053
    %v1134 = vpack.c.b16 %v1062, %v1054
    %v1135 = vpack.c.b16 %v1063, %v1055
    %v1136 = vpack.c.b16 %v1064, %v1056
    %v1137 = vpack.c.b16 %v1065, %v1057
    %v1138 = vpack.c.b16 %v1066, %v1058
    %v1139 = vpack.c.b16 %v1067, %v1059
    %v1140 = vpack.c.b16 %v1068, %v1060
    %v1141 = vpack.c.b16 %v1077, %v1069
    %v1142 = vpack.c.b16 %v1078, %v1070
    %v1143 = vpack.c.b16 %v1079, %v1071
    %v1144 = vpack.c.b16 %v1080, %v1072
    %v1145 = vpack.c.b16 %v1081, %v1073
    %v1146 = vpack.c.b16 %v1082, %v1074
    %v1147 = vpack.c.b16 %v1083, %v1075
    %v1148 = vpack.c.b16 %v1084, %v1076
    %1213 = vmatprep.subr.bf16.mxu0 %v1142
    %1214 = vmatpush1.bf16.msra.mxu0 %v1141
    %1215 = vmatprep.subr.bf16.mxu0 %v1134
    %1216 = vmatpush1.bf16.msra.mxu0 %v1133
    %1217 = vmatprep.subr.bf16.mxu0 %v1126
    %1218 = vmatpush1.bf16.msra.mxu0 %v1125
    %1219 = vmatprep.subr.bf16.mxu0 %v1118
    %1220 = vmatpush1.bf16.msra.mxu0 %v1117
    %1221 = vmatprep.subr.bf16.mxu0 %v1110
    %1222 = vmatpush1.bf16.msra.mxu0 %v1109
    %1223 = vmatprep.subr.bf16.mxu0 %v1102
    %1224 = vmatpush1.bf16.msra.mxu0 %v1101
    %1225 = vmatprep.subr.bf16.mxu0 %v1094
    %1226 = vmatpush1.bf16.msra.mxu0 %v1093
    %1227 = vmatprep.subr.bf16.mxu0 %v1086
    %1228 = vmatpush1.bf16.msra.mxu0 %v1085
    %1229 = vmatprep.subr.bf16.mxu0 0
    %1230 = vmatpush2.bf16.msra.mxu0 0
    %1231 = vmatprep.subr.bf16.mxu0 0
    %1232 = vmatpush2.bf16.msra.mxu0 0
    %1233 = vmatprep.subr.bf16.mxu0 0
    %1234 = vmatpush2.bf16.msra.mxu0 0
    %1235 = vmatprep.subr.bf16.mxu0 0
    %1236 = vmatpush2.bf16.msra.mxu0 0
    %1237 = vmatprep.subr.bf16.mxu0 0
    %1238 = vmatpush2.bf16.msra.mxu0 0
    %1239 = vmatprep.subr.bf16.mxu0 0
    %1240 = vmatpush2.bf16.msra.mxu0 0
    %1241 = vmatprep.subr.bf16.mxu0 0
    %1242 = vmatpush2.bf16.msra.mxu0 0
    %1243 = vmatprep.subr.bf16.mxu0 0
    %1244 = vmatpush2.bf16.msra.mxu0 0
    %1245 = vmatprep.mubr.bf16.mxu0 0
    %1246 = vmatmul.mubr.bf16.gmra.mxu0 %v786
    %v1247 = vpop.f32.mrf.mxu0
    %v1248 = vadd.f32 %v856, %v1247
    %v1249 = vpop.f32.mrf.mxu0
    %v1250 = vadd.f32 %v860, %v1249
    %v1251 = vpop.f32.mrf.mxu0
    %v1252 = vpop.f32.mrf.mxu0
    %1253 = vdwg.mxu0
    %1254 = vmatprep.subr.bf16.mxu0 %v1144
    %1255 = vmatpush1.bf16.msra.mxu0 %v1143
    %1256 = vmatprep.subr.bf16.mxu0 %v1136
    %1257 = vmatpush1.bf16.msra.mxu0 %v1135
    %1258 = vmatprep.subr.bf16.mxu0 %v1128
    %1259 = vmatpush1.bf16.msra.mxu0 %v1127
    %1260 = vmatprep.subr.bf16.mxu0 %v1120
    %1261 = vmatpush1.bf16.msra.mxu0 %v1119
    %1262 = vmatprep.subr.bf16.mxu0 %v1112
    %1263 = vmatpush1.bf16.msra.mxu0 %v1111
    %1264 = vmatprep.subr.bf16.mxu0 %v1104
    %1265 = vmatpush1.bf16.msra.mxu0 %v1103
    %1266 = vmatprep.subr.bf16.mxu0 %v1096
    %1267 = vmatpush1.bf16.msra.mxu0 %v1095
    %1268 = vmatprep.subr.bf16.mxu0 %v1088
    %1269 = vmatpush1.bf16.msra.mxu0 %v1087
    %1270 = vmatprep.subr.bf16.mxu0 0
    %1271 = vmatpush2.bf16.msra.mxu0 0
    %1272 = vmatprep.subr.bf16.mxu0 0
    %1273 = vmatpush2.bf16.msra.mxu0 0
    %1274 = vmatprep.subr.bf16.mxu0 0
    %1275 = vmatpush2.bf16.msra.mxu0 0
    %1276 = vmatprep.subr.bf16.mxu0 0
    %1277 = vmatpush2.bf16.msra.mxu0 0
    %1278 = vmatprep.subr.bf16.mxu0 0
    %1279 = vmatpush2.bf16.msra.mxu0 0
    %1280 = vmatprep.subr.bf16.mxu0 0
    %1281 = vmatpush2.bf16.msra.mxu0 0
    %1282 = vmatprep.subr.bf16.mxu0 0
    %1283 = vmatpush2.bf16.msra.mxu0 0
    %1284 = vmatprep.subr.bf16.mxu0 0
    %1285 = vmatpush2.bf16.msra.mxu0 0
    %1286 = vmatprep.mubr.bf16.mxu0 0
    %1287 = vmatmul.mubr.bf16.gmra.mxu0 %v786
    %v1288 = vpop.f32.mrf.mxu0
    %v1289 = vadd.f32 %v864, %v1288
    %v1290 = vpop.f32.mrf.mxu0
    %v1291 = vadd.f32 %v868, %v1290
    %v1292 = vpop.f32.mrf.mxu0
    %v1293 = vpop.f32.mrf.mxu0
    %1294 = vdwg.mxu0
    %1295 = vmatprep.subr.bf16.mxu0 %v1146
    %1296 = vmatpush1.bf16.msra.mxu0 %v1145
    %1297 = vmatprep.subr.bf16.mxu0 %v1138
    %1298 = vmatpush1.bf16.msra.mxu0 %v1137
    %1299 = vmatprep.subr.bf16.mxu0 %v1130
    %1300 = vmatpush1.bf16.msra.mxu0 %v1129
    %1301 = vmatprep.subr.bf16.mxu0 %v1122
    %1302 = vmatpush1.bf16.msra.mxu0 %v1121
    %1303 = vmatprep.subr.bf16.mxu0 %v1114
    %1304 = vmatpush1.bf16.msra.mxu0 %v1113
    %1305 = vmatprep.subr.bf16.mxu0 %v1106
    %1306 = vmatpush1.bf16.msra.mxu0 %v1105
    %1307 = vmatprep.subr.bf16.mxu0 %v1098
    %1308 = vmatpush1.bf16.msra.mxu0 %v1097
    %1309 = vmatprep.subr.bf16.mxu0 %v1090
    %1310 = vmatpush1.bf16.msra.mxu0 %v1089
    %1311 = vmatprep.subr.bf16.mxu0 0
    %1312 = vmatpush2.bf16.msra.mxu0 0
    %1313 = vmatprep.subr.bf16.mxu0 0
    %1314 = vmatpush2.bf16.msra.mxu0 0
    %1315 = vmatprep.subr.bf16.mxu0 0
    %1316 = vmatpush2.bf16.msra.mxu0 0
    %1317 = vmatprep.subr.bf16.mxu0 0
    %1318 = vmatpush2.bf16.msra.mxu0 0
    %1319 = vmatprep.subr.bf16.mxu0 0
    %1320 = vmatpush2.bf16.msra.mxu0 0
    %1321 = vmatprep.subr.bf16.mxu0 0
    %1322 = vmatpush2.bf16.msra.mxu0 0
    %1323 = vmatprep.subr.bf16.mxu0 0
    %1324 = vmatpush2.bf16.msra.mxu0 0
    %1325 = vmatprep.subr.bf16.mxu0 0
    %1326 = vmatpush2.bf16.msra.mxu0 0
    %1327 = vmatprep.mubr.bf16.mxu0 0
    %1328 = vmatmul.mubr.bf16.gmra.mxu0 %v786
    %v1329 = vpop.f32.mrf.mxu0
    %v1330 = vadd.f32 %v872, %v1329
    %v1331 = vpop.f32.mrf.mxu0
    %v1332 = vadd.f32 %v876, %v1331
    %v1333 = vpop.f32.mrf.mxu0
    %v1334 = vpop.f32.mrf.mxu0
    %1335 = vdwg.mxu0
    %1336 = vmatprep.subr.bf16.mxu0 %v1148
    %1337 = vmatpush1.bf16.msra.mxu0 %v1147
    %1338 = vmatprep.subr.bf16.mxu0 %v1140
    %1339 = vmatpush1.bf16.msra.mxu0 %v1139
    %1340 = vmatprep.subr.bf16.mxu0 %v1132
    %1341 = vmatpush1.bf16.msra.mxu0 %v1131
    %1342 = vmatprep.subr.bf16.mxu0 %v1124
    %1343 = vmatpush1.bf16.msra.mxu0 %v1123
    %1344 = vmatprep.subr.bf16.mxu0 %v1116
    %1345 = vmatpush1.bf16.msra.mxu0 %v1115
    %1346 = vmatprep.subr.bf16.mxu0 %v1108
    %1347 = vmatpush1.bf16.msra.mxu0 %v1107
    %1348 = vmatprep.subr.bf16.mxu0 %v1100
    %1349 = vmatpush1.bf16.msra.mxu0 %v1099
    %1350 = vmatprep.subr.bf16.mxu0 %v1092
    %1351 = vmatpush1.bf16.msra.mxu0 %v1091
    %1352 = vmatprep.subr.bf16.mxu0 0
    %1353 = vmatpush2.bf16.msra.mxu0 0
    %1354 = vmatprep.subr.bf16.mxu0 0
    %1355 = vmatpush2.bf16.msra.mxu0 0
    %1356 = vmatprep.subr.bf16.mxu0 0
    %1357 = vmatpush2.bf16.msra.mxu0 0
    %1358 = vmatprep.subr.bf16.mxu0 0
    %1359 = vmatpush2.bf16.msra.mxu0 0
    %1360 = vmatprep.subr.bf16.mxu0 0
    %1361 = vmatpush2.bf16.msra.mxu0 0
    %1362 = vmatprep.subr.bf16.mxu0 0
    %1363 = vmatpush2.bf16.msra.mxu0 0
    %1364 = vmatprep.subr.bf16.mxu0 0
    %1365 = vmatpush2.bf16.msra.mxu0 0
    %1366 = vmatprep.subr.bf16.mxu0 0
    %1367 = vmatpush2.bf16.msra.mxu0 0
    %1368 = vmatprep.mubr.bf16.mxu0 0
    %1369 = vmatmul.mubr.bf16.gmra.mxu0 %v786
    %v1370 = vpop.f32.mrf.mxu0
    %v1371 = vadd.f32 %v880, %v1370
    %v1372 = vpop.f32.mrf.mxu0
    %v1373 = vadd.f32 %v884, %v1372
    %v1374 = vpop.f32.mrf.mxu0
    %v1375 = vpop.f32.mrf.mxu0
    %1376 = vdwg.mxu0
    %v1385 = vcombine.low %v1248, %v1250
    %v1386 = vcombine.low %v1289, %v1291
    %v1388 = vunpack.c.l.s4 1983009808
    %v1389 = vunpack.c.0.s8 %v1388
    %v1390 = vlaneseq
    %v1391 = vshrl.u32 %v1390, 7
    %v1392 = vsub.s32 %v1389, %v1391
    %v1393 = vrot.slane %v1385, %v1392
    %v1395 = vunpack.c.l.s4 1983009808
    %v1396 = vunpack.c.0.s8 %v1395
    %v1397 = vlaneseq
    %v1398 = vshrl.u32 %v1397, 7
    %v1399 = vsub.s32 %v1396, %v1398
    %v1400 = vrot.slane %v1386, %v1399
    %v1401 = vcombine.low %v1393, %v1400
    %v1402 = vcombine.low %v1330, %v1332
    %v1403 = vcombine.low %v1371, %v1373
    %v1405 = vunpack.c.l.s4 1983009808
    %v1406 = vunpack.c.0.s8 %v1405
    %v1407 = vlaneseq
    %v1408 = vshrl.u32 %v1407, 7
    %v1409 = vsub.s32 %v1406, %v1408
    %v1410 = vrot.slane %v1402, %v1409
    %v1412 = vunpack.c.l.s4 1983009808
    %v1413 = vunpack.c.0.s8 %v1412
    %v1414 = vlaneseq
    %v1415 = vshrl.u32 %v1414, 7
    %v1416 = vsub.s32 %v1413, %v1415
    %v1417 = vrot.slane %v1403, %v1416
    %v1418 = vcombine.low %v1410, %v1417
    %1421 = vst [vmem:[%s6] sm:$0xff] %v1401
    %1422 = vst [vmem:[%s6 + $0x8] sm:$0xff] %v1418
    // Predicated region
    $region30: #{pca_forward.1} parent=1 // pred_check
      _
    $region31: #{pca_forward.1} parent=1 // pred_check_branch
      %1424 = sbr.rel (0) target = $region33
    $region32: #{pca_forward.1} parent=1 // pred_region
      %s1426 = ssub.s32 32, 32
      %1427 = vsyncadd [#allocation4], %s1426
      %s1429 = sshll.u32 [#allocation7], 4
      %s1430 = int_to_ptr.vmem [resolvable:$true] %s1429
      %1432 = dma.vmem_to_hbm [thread:$0]  %s1430, 32, %s5, [#allocation4]
    $region33: #{pca_forward.1} parent=1 // pred_fallthru
      _
    // Predicated region
    $region34: #{pca_forward.1} parent=1 // pred_check
      _
    $region35: #{pca_forward.1} parent=1 // pred_check_branch
      %1434 = sbr.rel (0) target = $region37
    $region36: #{pca_forward.1} parent=1 // pred_region
      _
    $region37: #{pca_forward.1} parent=1 // pred_fallthru
      _
    // Predicated region
    $region38: #{pca_forward.1} parent=1 // pred_check
      _
    $region39: #{pca_forward.1} parent=1 // pred_check_branch
      %1436 = sbr.rel (0) target = $region41
    $region40: #{pca_forward.1} parent=1 // pred_region
      %1437 = dma.done [#allocation4], 32
    $region41: #{pca_forward.1} parent=1 // pred_fallthru
      _
    // Predicated region
    $region42: #{pca_forward.1} parent=1 // pred_check
      _
    $region43: #{pca_forward.1} parent=1 // pred_check_branch
      %1439 = sbr.rel (0) target = $region45
    $region44: #{pca_forward.1} parent=1 // pred_region
      _
    $region45: #{pca_forward.1} parent=1 // pred_fallthru
      _
    %1440 = vsyncpa [#allocation3], 1
    %1441 = vsyncpa [#allocation6], 1
    %1442 = vsyncpa [#allocation4], 1

</llo_original>
